<compile_context>
chip_gen: v7x
topology: tpu7x:2x2x1
jax: 0.10.0
libtpu: 0.0.40
codegen_flags: <defaults>
</compile_context>

<pallas_src>
import functools
import math

import jax
import jax.numpy as jnp
from jax.experimental import pallas as pl
from jax.experimental.pallas import tpu as pltpu


def _round_up(x, m):
    return ((x + m - 1) // m) * m


def _sublane_multiple(dtype) -> int:
    # Minimum sublane tile per dtype packing: f32 -> 8, bf16 -> 16, int8/fp8 -> 32.
    return {4: 8, 2: 16, 1: 32}.get(jnp.dtype(dtype).itemsize, 8)


def _attention_kernel(q_ref, k_ref, v_ref, out_ref, w_ref, *, s_chunk):
    # q_ref: (Bt, K)   k_ref: (Bt, S, K)   v_ref: (Bt, S, V)
    # out_ref: (Bt, V) w_ref: (Bt, S)
    Bt, S, K = k_ref.shape
    V = v_ref.shape[-1]

    # Fold the 1/sqrt(K) scale into q (Bt*K mults instead of Bt*S).
    scale = 1.0 / math.sqrt(K)
    qs = q_ref[...].astype(jnp.float32) * scale          # (Bt, K)
    qs_b = qs[:, None, :]                                 # (Bt, 1, K), hoisted

    # ---- Phase 1: scores[b, s] = sum_k qs[b,k] * keys[b,s,k] --------------
    # S is chunked so the f32 cast + broadcast-multiply temporaries stay
    # bounded to (Bt, s_chunk, K) no matter how big the VMEM tile is.
    # Memory-bound kernel (~0.5 FLOP/byte) -> VPU multiply + XLU lane-reduce,
    # no transposes, no 1-row MXU matmuls.
    score_chunks = []
    for c0 in range(0, S, s_chunk):
        sc = min(s_chunk, S - c0)
        k_c = k_ref[:, c0:c0 + sc, :].astype(jnp.float32)            # (Bt, sc, K)
        score_chunks.append(jnp.sum(qs_b * k_c, axis=-1))            # (Bt, sc)
    scores = (score_chunks[0] if len(score_chunks) == 1
              else jnp.concatenate(score_chunks, axis=-1))           # (Bt, S) f32

    # ---- Numerically stable softmax over the sequence axis -----------------
    # Exact division: the weights are a user-visible output and must match the
    # reference to tight tolerance (the denominator is only (Bt,1), so the
    # exact reciprocal costs essentially nothing).
    m = jnp.max(scores, axis=-1, keepdims=True)                      # (Bt, 1)
    e = jnp.exp(scores - m)                                          # (Bt, S)
    denom = jnp.sum(e, axis=-1, keepdims=True)                       # (Bt, 1)
    w = e / denom                                                    # (Bt, S)

    # ---- Phase 2: out[b, v] = sum_s w[b, s] * values[b, s, v] --------------
    out = jnp.zeros((Bt, V), dtype=jnp.float32)
    for c0 in range(0, S, s_chunk):
        sc = min(s_chunk, S - c0)
        v_c = v_ref[:, c0:c0 + sc, :].astype(jnp.float32)            # (Bt, sc, V)
        w_c = w[:, c0:c0 + sc]                                       # (Bt, sc)
        out = out + jnp.sum(w_c[:, :, None] * v_c, axis=1)           # (Bt, V)

    out_ref[...] = out.astype(out_ref.dtype)
    w_ref[...] = w.astype(w_ref.dtype)


@functools.partial(jax.jit, static_argnames=("block_b",))
def attention(query, keys, values, *, block_b=None):
    """
    query:  [B, Q]
    keys:   [B, S, K]   (K == Q)
    values: [B, S, V]
    returns (att_out [B, V], soft_att_weights [B, S])
    """
    B, Q = query.shape
    Bk, S, K = keys.shape
    Bv, Sv, V = values.shape
    assert K == Q and Bk == B and Bv == B and Sv == S

    in_dtype = keys.dtype
    itemsize = jnp.dtype(in_dtype).itemsize
    sub = _sublane_multiple(in_dtype)
    out_dtype = query.dtype
    out_itemsize = jnp.dtype(out_dtype).itemsize

    # --- VMEM footprint per batch row (with lane/sublane padding) -----------
    Kp = _round_up(K, 128)
    Vp = _round_up(V, 128)
    Sp_sub = _round_up(S, sub)      # S is a sublane axis of the (B,S,K)/(B,S,V) tiles
    Sp_lane = _round_up(S, 128)     # S is the lane axis of the (B,S) weights output
    row_tile_bytes = (
        Kp * itemsize                      # q
        + Sp_sub * Kp * itemsize           # keys
        + Sp_sub * Vp * itemsize           # values
        + Vp * out_itemsize                # out
        + Sp_lane * out_itemsize           # weights
    )
    # HBM bytes actually streamed per batch row (for the per-step DMA target).
    row_hbm_bytes = itemsize * (K + S * K + S * V) + out_itemsize * (V + S)

    # --- Per-generation VMEM budget ------------------------------------------
    try:
        vmem_cap = int(pltpu.get_tpu_info().vmem_capacity_bytes)
    except Exception:  # interpret mode / unknown host: assume v7x-sized VMEM
        vmem_cap = 64 << 20
    temp_reserve = 8 << 20                       # in-kernel f32 chunk temporaries
    block_budget = max(4 << 20, int(0.70 * vmem_cap) - temp_reserve)

    # --- Tiny-batch handling: pad only when B is below one sublane group ----
    Bp = B
    if B < sub:
        Bp = sub
        pad = Bp - B
        query = jnp.pad(query, ((0, pad), (0, 0)))
        keys = jnp.pad(keys, ((0, pad), (0, 0), (0, 0)))
        values = jnp.pad(values, ((0, pad), (0, 0), (0, 0)))
    # For B >= sub we do NOT pad keys/values (that would copy the dominant
    # tensors in HBM); the partial last grid block is handled by masked writes.

    # --- Block size selection -------------------------------------------------
    if block_b is None:
        # (a) largest block that fits the VMEM budget (x2 for double buffering)
        bt_vmem = max(sub, (block_budget // (2 * row_tile_bytes)) // sub * sub)
        # (b) target ~2 MiB of streamed bytes per grid step: big enough to
        #     amortize the ~0.35us per-step overhead, small enough to keep
        #     plenty of grid steps.
        bt_dma = max(sub, _round_up((2 << 20) // max(1, row_hbm_bytes), sub))
        block_b = min(bt_vmem, bt_dma, 1024)
        # Ensure >= 2 grid steps when the batch allows it, so the "parallel"
        # batch axis can actually shard across TensorCores (v7x megacore).
        if Bp > sub:
            block_b = min(block_b, max(sub, _round_up(pl.cdiv(Bp, 2), sub)))
    else:
        block_b = max(sub, _round_up(block_b, sub))
    # Keep every block start in-bounds; only the final block may be partial.
    block_b = min(block_b, max(sub, (Bp // sub) * sub))

    grid = (pl.cdiv(Bp, block_b),)

    # In-kernel S-chunk size: keep per-chunk f32 temporaries around ~4 MiB.
    s_chunk = (4 << 20) // max(1, block_b * (Kp + Vp) * 4)
    s_chunk = max(32, (s_chunk // 32) * 32)
    s_chunk = min(s_chunk, _round_up(S, 32))

    # Scoped VMEM limit: what we need plus headroom, capped per generation.
    vmem_need = 2 * block_b * row_tile_bytes + temp_reserve
    vmem_limit = int(min(max(vmem_need + (8 << 20), 32 << 20),
                         int(0.85 * vmem_cap)))
    vmem_limit = max(vmem_limit, 32 << 20)

    out_shapes = (
        jax.ShapeDtypeStruct((Bp, V), out_dtype),
        jax.ShapeDtypeStruct((Bp, S), out_dtype),
    )

    grid_spec = pltpu.PrefetchScalarGridSpec(
        num_scalar_prefetch=0,
        grid=grid,
        in_specs=[
            pl.BlockSpec((block_b, Q), lambda b: (b, 0)),
            pl.BlockSpec((block_b, S, K), lambda b: (b, 0, 0)),
            pl.BlockSpec((block_b, S, V), lambda b: (b, 0, 0)),
        ],
        out_specs=[
            pl.BlockSpec((block_b, V), lambda b: (b, 0)),
            pl.BlockSpec((block_b, S), lambda b: (b, 0)),
        ],
    )

    out, w = pl.pallas_call(
        functools.partial(_attention_kernel, s_chunk=s_chunk),
        out_shape=out_shapes,
        grid_spec=grid_spec,
        compiler_params=pltpu.CompilerParams(
            dimension_semantics=("parallel",),   # batch axis shards across TCs
            vmem_limit_bytes=vmem_limit,
        ),
    )(query, keys, values)

    if Bp != B:
        out = out[:B]
        w = w[:B]
    return out, w


def _reference(query, keys, values):
    scale = 1.0 / math.sqrt(keys.shape[2])
    scores = jnp.einsum("bq,bsq->bs", query, keys) * scale
    w = jax.nn.softmax(scores, axis=1)
    out = jnp.einsum("bs,bsv->bv", w, values)
    return out, w


if __name__ == "__main__":
    key = jax.random.PRNGKey(0)
    kq, kk, _ = jax.random.split(key, 3)

    B, S, K = 2, 8, 32   # K == Q; keys == values per the module docstring
    V = K

    query = jax.random.normal(kq, (B, K), dtype=jnp.float32)
    keys = jax.random.normal(kk, (B, S, K), dtype=jnp.float32)
    values = keys  # docstring: keys == values

    out, weights = attention(query, keys, values)
    jax.block_until_ready((out, weights))

    ref_out, ref_w = _reference(query, keys, values)
    assert out.shape == (B, V) and weights.shape == (B, S)
    assert jnp.allclose(out, ref_out, atol=1e-4, rtol=1e-4)
    assert jnp.allclose(weights, ref_w, atol=1e-4, rtol=1e-4)

    print("KERNEL_OK")
</pallas_src>

<mosaic_0001>
module attributes {stable_mosaic.version = 11 : i64} {
  func.func @_attention_kernel(%arg0: i32, %arg1: memref<8x32xf32, #tpu.memory_space<vmem>>, %arg2: memref<8x8x32xf32, #tpu.memory_space<vmem>>, %arg3: memref<8x8x32xf32, #tpu.memory_space<vmem>>, %arg4: memref<8x32xf32, #tpu.memory_space<vmem>>, %arg5: memref<8x8xf32, #tpu.memory_space<vmem>>) attributes {dimension_semantics = [#tpu.dimension_semantics<parallel>], iteration_bounds = array<i64: 1>, scalar_prefetch = 0 : i64, scratch_operands = 0 : i64, tpu.core_type = #tpu.core_type<tc>, window_params = [{transform_indices = @transform_0, window_bounds = array<i64: 8, 32>}, {transform_indices = @transform_1, window_bounds = array<i64: 8, 8, 32>}, {transform_indices = @transform_2, window_bounds = array<i64: 8, 8, 32>}, {transform_indices = @transform_3, window_bounds = array<i64: 8, 32>}, {transform_indices = @transform_4, window_bounds = array<i64: 8, 8>}]} {
    %c0 = arith.constant 0 : index
    %c0_0 = arith.constant 0 : index
    %0 = vector.load %arg1[%c0, %c0_0] : memref<8x32xf32, #tpu.memory_space<vmem>>, vector<8x32xf32>
    %cst = arith.constant 0.176776692 : f32
    %1 = vector.broadcast %cst : f32 to vector<8x32xf32>
    %2 = arith.mulf %0, %1 : vector<8x32xf32>
    %3 = vector.shape_cast %2 : vector<8x32xf32> to vector<8x1x32xf32>
    %c0_1 = arith.constant 0 : index
    %c0_2 = arith.constant 0 : index
    %c0_3 = arith.constant 0 : index
    %4 = vector.load %arg2[%c0_1, %c0_2, %c0_3] : memref<8x8x32xf32, #tpu.memory_space<vmem>>, vector<8x8x32xf32>
    %5 = vector.broadcast %3 : vector<8x1x32xf32> to vector<8x8x32xf32>
    %6 = arith.mulf %5, %4 : vector<8x8x32xf32>
    %cst_4 = arith.constant dense<0.000000e+00> : vector<8x8xf32>
    %7 = vector.multi_reduction <add>, %6, %cst_4 [2] : vector<8x8x32xf32> to vector<8x8xf32>
    %cst_5 = arith.constant dense<0xFF800000> : vector<8xf32>
    %8 = vector.multi_reduction <maximumf>, %7, %cst_5 [1] : vector<8x8xf32> to vector<8xf32>
    %9 = vector.shape_cast %8 : vector<8xf32> to vector<8x1xf32>
    %10 = vector.broadcast %9 : vector<8x1xf32> to vector<8x8xf32>
    %11 = arith.subf %7, %10 : vector<8x8xf32>
    %12 = math.exp %11 : vector<8x8xf32>
    %cst_6 = arith.constant dense<0.000000e+00> : vector<8xf32>
    %13 = vector.multi_reduction <add>, %12, %cst_6 [1] : vector<8x8xf32> to vector<8xf32>
    %14 = vector.shape_cast %13 : vector<8xf32> to vector<8x1xf32>
    %15 = vector.broadcast %14 : vector<8x1xf32> to vector<8x8xf32>
    %16 = arith.divf %12, %15 : vector<8x8xf32>
    %cst_7 = arith.constant 0.000000e+00 : f32
    %17 = vector.broadcast %cst_7 : f32 to vector<8x32xf32>
    %c0_8 = arith.constant 0 : index
    %c0_9 = arith.constant 0 : index
    %c0_10 = arith.constant 0 : index
    %18 = vector.load %arg3[%c0_8, %c0_9, %c0_10] : memref<8x8x32xf32, #tpu.memory_space<vmem>>, vector<8x8x32xf32>
    %19 = vector.shape_cast %16 : vector<8x8xf32> to vector<8x8x1xf32>
    %20 = vector.broadcast %19 : vector<8x8x1xf32> to vector<8x8x32xf32>
    %21 = arith.mulf %20, %18 : vector<8x8x32xf32>
    %cst_11 = arith.constant dense<0.000000e+00> : vector<8x32xf32>
    %22 = vector.multi_reduction <add>, %21, %cst_11 [1] : vector<8x8x32xf32> to vector<8x32xf32>
    %23 = arith.addf %17, %22 : vector<8x32xf32>
    %c0_12 = arith.constant 0 : index
    %c0_13 = arith.constant 0 : index
    %24 = vector.load %arg4[%c0_12, %c0_13] : memref<8x32xf32, #tpu.memory_space<vmem>>, vector<8x32xf32>
    tpu.vector_store %arg4[%c0_12, %c0_13], %23 {strides = array<i32>} : memref<8x32xf32, #tpu.memory_space<vmem>>, vector<8x32xf32>,
    %c0_14 = arith.constant 0 : index
    %c0_15 = arith.constant 0 : index
    %25 = vector.load %arg5[%c0_14, %c0_15] : memref<8x8xf32, #tpu.memory_space<vmem>>, vector<8x8xf32>
    tpu.vector_store %arg5[%c0_14, %c0_15], %16 {strides = array<i32>} : memref<8x8xf32, #tpu.memory_space<vmem>>, vector<8x8xf32>,
    return
  }
  func.func @transform_0(%arg0: i32) -> (i32, i32) {
    %c0_i32 = arith.constant 0 : i32
    %c0_i32_0 = arith.constant 0 : i32
    return %arg0, %c0_i32 : i32, i32
  }
  func.func @transform_1(%arg0: i32) -> (i32, i32, i32) {
    %c0_i32 = arith.constant 0 : i32
    %c0_i32_0 = arith.constant 0 : i32
    %c0_i32_1 = arith.constant 0 : i32
    return %arg0, %c0_i32, %c0_i32_0 : i32, i32, i32
  }
  func.func @transform_2(%arg0: i32) -> (i32, i32, i32) {
    %c0_i32 = arith.constant 0 : i32
    %c0_i32_0 = arith.constant 0 : i32
    %c0_i32_1 = arith.constant 0 : i32
    return %arg0, %c0_i32, %c0_i32_0 : i32, i32, i32
  }
  func.func @transform_3(%arg0: i32) -> (i32, i32) {
    %c0_i32 = arith.constant 0 : i32
    %c0_i32_0 = arith.constant 0 : i32
    return %arg0, %c0_i32 : i32, i32
  }
  func.func @transform_4(%arg0: i32) -> (i32, i32) {
    %c0_i32 = arith.constant 0 : i32
    %c0_i32_0 = arith.constant 0 : i32
    return %arg0, %c0_i32 : i32, i32
  }
}

</mosaic_0001>

<llo_original>
// kernel: attention.1
$region0: #{attention.1}
  #allocation0 [shape = 'u32[]', space=smem, size = 0x4, offset = 0x4, fixed_abs, tag = 'smem constant byte address 0x4 - core index']
  #allocation1 [shape = 'u32[144,128]{1,0:T(1,128)}', space=vmem, size = 0x12000, scoped, tag = 'internal scratch']
  %s0 = inlined_call_operand.vmem [shape: f32[8,32], index: 0, kind: input, shape index: {}]
  %s1 = inlined_call_operand.vmem [shape: f32[8,8,32], index: 1, kind: input, shape index: {}]
  %s2 = inlined_call_operand.vmem [shape: f32[8,8,32], index: 2, kind: input, shape index: {}]
  %s3 = inlined_call_operand.vmem [shape: f32[8,32], index: 3, kind: output, shape index: {0}]
  %s4 = inlined_call_operand.vmem [shape: f32[8,8], index: 4, kind: output, shape index: {1}]
  %5 = xla_tuple %s3, %s4
  %s6 = sld [smem:[#allocation0]]
  $region30: #{attention.1} parent=0
    _
  %s8 = ssub.s32 1, %s6
  %s9 = scalar_select 0, %s8, %s6
  // Predicated region
  $region2: #{attention.1} parent=0 // pred_check
    _
  $region3: #{attention.1} parent=0 // pred_check_branch
    %11 = sbr.rel (0) target = $region5
  $region4: #{attention.1} parent=0 // pred_region
    _
  $region5: #{attention.1} parent=0 // pred_fallthru
    _
  // Predicated region
  $region6: #{attention.1} parent=0 // pred_check
    _
  $region7: #{attention.1} parent=0 // pred_check_branch
    %13 = sbr.rel (0) target = $region9
  $region8: #{attention.1} parent=0 // pred_region
    _
  $region9: #{attention.1} parent=0 // pred_fallthru
    _
  // Predicated region
  $region10: #{attention.1} parent=0 // pred_check
    _
  $region11: #{attention.1} parent=0 // pred_check_branch
    %15 = sbr.rel (0) target = $region13
  $region12: #{attention.1} parent=0 // pred_region
    _
  $region13: #{attention.1} parent=0 // pred_fallthru
    _
  %v16 = vld [vmem:[%s0] sm:$0xff]
  %v17 = vmul.f32 %v16, 0.17677669
  %v19 = vcombine.high %v17, %v17
  %v21 = vunpack.c.l.s4 1966171168
  %v22 = vunpack.c.0.s8 %v21
  %v23 = vlaneseq
  %v24 = vshrl.u32 %v23, 7
  %v25 = vsub.s32 %v22, %v24
  %v26 = vrot.slane %v17, %v25
  %v28 = vunpack.c.l.s4 1966171168
  %v29 = vunpack.c.0.s8 %v28
  %v30 = vlaneseq
  %v31 = vshrl.u32 %v30, 7
  %v32 = vsub.s32 %v29, %v31
  %v33 = vrot.slane %v19, %v32
  %v34 = vcombine.high %v26, %v26
  %v35 = vcombine.high %v33, %v33
  %v37 = vunpack.c.l.s4 1966171168
  %v38 = vunpack.c.0.s8 %v37
  %v39 = vlaneseq
  %v40 = vshrl.u32 %v39, 7
  %v41 = vsub.s32 %v38, %v40
  %v42 = vrot.slane %v26, %v41
  %v44 = vunpack.c.l.s4 1966171168
  %v45 = vunpack.c.0.s8 %v44
  %v46 = vlaneseq
  %v47 = vshrl.u32 %v46, 7
  %v48 = vsub.s32 %v45, %v47
  %v49 = vrot.slane %v33, %v48
  %v51 = vunpack.c.l.s4 1966171168
  %v52 = vunpack.c.0.s8 %v51
  %v53 = vlaneseq
  %v54 = vshrl.u32 %v53, 7
  %v55 = vsub.s32 %v52, %v54
  %v56 = vrot.slane %v34, %v55
  %v58 = vunpack.c.l.s4 1966171168
  %v59 = vunpack.c.0.s8 %v58
  %v60 = vlaneseq
  %v61 = vshrl.u32 %v60, 7
  %v62 = vsub.s32 %v59, %v61
  %v63 = vrot.slane %v35, %v62
  %v64 = vcombine.high %v42, %v42
  %v65 = vcombine.high %v49, %v49
  %v66 = vcombine.high %v56, %v56
  %v67 = vcombine.high %v63, %v63
  %v68 = vld [vmem:[%s1] sm:$0xff]
  %v69 = vld [vmem:[%s1 + $0x8] sm:$0xff]
  %v70 = vld [vmem:[%s1 + $0x10] sm:$0xff]
  %v71 = vld [vmem:[%s1 + $0x18] sm:$0xff]
  %v72 = vld [vmem:[%s1 + $0x20] sm:$0xff]
  %v73 = vld [vmem:[%s1 + $0x28] sm:$0xff]
  %v74 = vld [vmem:[%s1 + $0x30] sm:$0xff]
  %v75 = vld [vmem:[%s1 + $0x38] sm:$0xff]
  %v76 = vlaneseq
  %v77 = vshrl.u32 %v76, 7
  %v78 = vsub.s32 0, %v77
  %v79 = vrot.slane %v42, %v78
  %v80 = vlaneseq
  %v81 = vshrl.u32 %v80, 7
  %v82 = vsub.s32 0, %v81
  %v83 = vrot.slane %v56, %v82
  %v84 = vlaneseq
  %v85 = vshrl.u32 %v84, 7
  %v86 = vsub.s32 0, %v85
  %v87 = vrot.slane %v64, %v86
  %v88 = vlaneseq
  %v89 = vshrl.u32 %v88, 7
  %v90 = vsub.s32 0, %v89
  %v91 = vrot.slane %v66, %v90
  %v92 = vlaneseq
  %v93 = vshrl.u32 %v92, 7
  %v94 = vsub.s32 0, %v93
  %v95 = vrot.slane %v49, %v94
  %v96 = vlaneseq
  %v97 = vshrl.u32 %v96, 7
  %v98 = vsub.s32 0, %v97
  %v99 = vrot.slane %v63, %v98
  %v100 = vlaneseq
  %v101 = vshrl.u32 %v100, 7
  %v102 = vsub.s32 0, %v101
  %v103 = vrot.slane %v65, %v102
  %v104 = vlaneseq
  %v105 = vshrl.u32 %v104, 7
  %v106 = vsub.s32 0, %v105
  %v107 = vrot.slane %v67, %v106
  %v116 = vmul.f32 %v79, %v68
  %v117 = vmul.f32 %v83, %v69
  %v118 = vmul.f32 %v87, %v70
  %v119 = vmul.f32 %v91, %v71
  %v120 = vmul.f32 %v95, %v72
  %v121 = vmul.f32 %v99, %v73
  %v122 = vmul.f32 %v103, %v74
  %v123 = vmul.f32 %v107, %v75
  %vm124 = vcmask 261120
  %v125 = vsel %vm124, %v116, 0.0
  %126 = vadd.xlane.f32.xlu0 %v125
  %v127 = vpop.xlane.xlu0 %126
  %v128 = vsel %vm124, %v117, 0.0
  %129 = vadd.xlane.f32.xlu0 %v128
  %v130 = vpop.xlane.xlu0 %129
  %v131 = vsel %vm124, %v118, 0.0
  %132 = vadd.xlane.f32.xlu0 %v131
  %v133 = vpop.xlane.xlu0 %132
  %v134 = vsel %vm124, %v119, 0.0
  %135 = vadd.xlane.f32.xlu0 %v134
  %v136 = vpop.xlane.xlu0 %135
  %v137 = vsel %vm124, %v120, 0.0
  %138 = vadd.xlane.f32.xlu0 %v137
  %v139 = vpop.xlane.xlu0 %138
  %v140 = vsel %vm124, %v121, 0.0
  %141 = vadd.xlane.f32.xlu0 %v140
  %v142 = vpop.xlane.xlu0 %141
  %v143 = vsel %vm124, %v122, 0.0
  %144 = vadd.xlane.f32.xlu0 %v143
  %v145 = vpop.xlane.xlu0 %144
  %v146 = vsel %vm124, %v123, 0.0
  %147 = vadd.xlane.f32.xlu0 %v146
  %v148 = vpop.xlane.xlu0 %147
  %v157 = vlaneseq
  %v158 = vand.u32 %v157, 127
  %v159 = vlaneseq
  %v160 = vshrl.u32 %v159, 7
  %v161 = vsub.s32 %v158, %v160
  %v162 = vrot.slane %v127, %v161
  %v163 = vlaneseq
  %v164 = vshrl.u32 %v163, 7
  %v165 = vsub.s32 %v158, %v164
  %v166 = vrot.slane %v130, %v165
  %v167 = vlaneseq
  %v168 = vshrl.u32 %v167, 7
  %v169 = vsub.s32 %v158, %v168
  %v170 = vrot.slane %v133, %v169
  %v171 = vlaneseq
  %v172 = vshrl.u32 %v171, 7
  %v173 = vsub.s32 %v158, %v172
  %v174 = vrot.slane %v136, %v173
  %v175 = vlaneseq
  %v176 = vshrl.u32 %v175, 7
  %v177 = vsub.s32 %v158, %v176
  %v178 = vrot.slane %v139, %v177
  %v179 = vlaneseq
  %v180 = vshrl.u32 %v179, 7
  %v181 = vsub.s32 %v158, %v180
  %v182 = vrot.slane %v142, %v181
  %v183 = vlaneseq
  %v184 = vshrl.u32 %v183, 7
  %v185 = vsub.s32 %v158, %v184
  %v186 = vrot.slane %v145, %v185
  %v187 = vlaneseq
  %v188 = vshrl.u32 %v187, 7
  %v189 = vsub.s32 %v158, %v188
  %v190 = vrot.slane %v148, %v189
  %vm191 = vcmask 1041409
  %v192 = vsel %vm191, %v166, %v162
  %vm193 = vcmask 1042434
  %v194 = vsel %vm193, %v170, %v192
  %vm195 = vcmask 1043459
  %v196 = vsel %vm195, %v174, %v194
  %vm197 = vcmask 1044484
  %v198 = vsel %vm197, %v178, %v196
  %vm199 = vcmask 1045509
  %v200 = vsel %vm199, %v182, %v198
  %vm201 = vcmask 1046534
  %v202 = vsel %vm201, %v186, %v200
  %vm203 = vcmask 1047559
  %v204 = vsel %vm203, %v190, %v202
  %vm206 = vcmask 64512
  %v207 = vsel %vm206, %v204, -inf
  %208 = vmax.xlane.f32.xlu0 %v207
  %v209 = vpop.xlane.xlu0 %208
  %v211 = vlaneseq
  %v212 = vshrl.u32 %v211, 7
  %v213 = vsub.s32 0, %v212
  %v214 = vrot.slane %v209, %v213
  %v215 = vlaneseq
  %v216 = vshrl.u32 %v215, 7
  %v217 = vsub.s32 1, %v216
  %v218 = vrot.slane %v209, %v217
  %v219 = vlaneseq
  %v220 = vshrl.u32 %v219, 7
  %v221 = vsub.s32 2, %v220
  %v222 = vrot.slane %v209, %v221
  %v223 = vlaneseq
  %v224 = vshrl.u32 %v223, 7
  %v225 = vsub.s32 3, %v224
  %v226 = vrot.slane %v209, %v225
  %v227 = vlaneseq
  %v228 = vshrl.u32 %v227, 7
  %v229 = vsub.s32 4, %v228
  %v230 = vrot.slane %v209, %v229
  %v231 = vlaneseq
  %v232 = vshrl.u32 %v231, 7
  %v233 = vsub.s32 5, %v232
  %v234 = vrot.slane %v209, %v233
  %v235 = vlaneseq
  %v236 = vshrl.u32 %v235, 7
  %v237 = vsub.s32 6, %v236
  %v238 = vrot.slane %v209, %v237
  %v239 = vlaneseq
  %v240 = vshrl.u32 %v239, 7
  %v241 = vsub.s32 7, %v240
  %v242 = vrot.slane %v209, %v241
  %v251 = vsub.f32 %v127, %v214
  %v252 = vsub.f32 %v130, %v218
  %v253 = vsub.f32 %v133, %v222
  %v254 = vsub.f32 %v136, %v226
  %v255 = vsub.f32 %v139, %v230
  %v256 = vsub.f32 %v142, %v234
  %v257 = vsub.f32 %v145, %v238
  %v258 = vsub.f32 %v148, %v242
  %v259 = vmul.f32 %v251, 1.442695
  %v260 = vpow.pop %v259
  %v261 = vmul.f32 %v252, 1.442695
  %v262 = vpow.pop %v261
  %v263 = vmul.f32 %v253, 1.442695
  %v264 = vpow.pop %v263
  %v265 = vmul.f32 %v254, 1.442695
  %v266 = vpow.pop %v265
  %v267 = vmul.f32 %v255, 1.442695
  %v268 = vpow.pop %v267
  %v269 = vmul.f32 %v256, 1.442695
  %v270 = vpow.pop %v269
  %v271 = vmul.f32 %v257, 1.442695
  %v272 = vpow.pop %v271
  %v273 = vmul.f32 %v258, 1.442695
  %v274 = vpow.pop %v273
  %283 = vset.pattern.permute.xlu0 0
  %284 = vperm.xlu0 %283, %v260
  %v285 = vpop.permute.xlu0 %284
  %286 = vset.pattern.permute.xlu0 0
  %287 = vperm.xlu0 %286, %v262
  %v288 = vpop.permute.xlu0 %287
  %289 = vset.pattern.permute.xlu0 0
  %290 = vperm.xlu0 %289, %v264
  %v291 = vpop.permute.xlu0 %290
  %292 = vset.pattern.permute.xlu0 0
  %293 = vperm.xlu0 %292, %v266
  %v294 = vpop.permute.xlu0 %293
  %295 = vset.pattern.permute.xlu0 0
  %296 = vperm.xlu0 %295, %v268
  %v297 = vpop.permute.xlu0 %296
  %298 = vset.pattern.permute.xlu0 0
  %299 = vperm.xlu0 %298, %v270
  %v300 = vpop.permute.xlu0 %299
  %301 = vset.pattern.permute.xlu0 0
  %302 = vperm.xlu0 %301, %v272
  %v303 = vpop.permute.xlu0 %302
  %304 = vset.pattern.permute.xlu0 0
  %305 = vperm.xlu0 %304, %v274
  %v306 = vpop.permute.xlu0 %305
  %v307 = vlaneseq
  %v308 = vshrl.u32 %v307, 7
  %v309 = vsub.s32 %v158, %v308
  %v310 = vrot.slane %v285, %v309
  %v311 = vlaneseq
  %v312 = vshrl.u32 %v311, 7
  %v313 = vsub.s32 %v158, %v312
  %v314 = vrot.slane %v288, %v313
  %v315 = vlaneseq
  %v316 = vshrl.u32 %v315, 7
  %v317 = vsub.s32 %v158, %v316
  %v318 = vrot.slane %v291, %v317
  %v319 = vlaneseq
  %v320 = vshrl.u32 %v319, 7
  %v321 = vsub.s32 %v158, %v320
  %v322 = vrot.slane %v294, %v321
  %v323 = vlaneseq
  %v324 = vshrl.u32 %v323, 7
  %v325 = vsub.s32 %v158, %v324
  %v326 = vrot.slane %v297, %v325
  %v327 = vlaneseq
  %v328 = vshrl.u32 %v327, 7
  %v329 = vsub.s32 %v158, %v328
  %v330 = vrot.slane %v300, %v329
  %v331 = vlaneseq
  %v332 = vshrl.u32 %v331, 7
  %v333 = vsub.s32 %v158, %v332
  %v334 = vrot.slane %v303, %v333
  %v335 = vlaneseq
  %v336 = vshrl.u32 %v335, 7
  %v337 = vsub.s32 %v158, %v336
  %v338 = vrot.slane %v306, %v337
  %v339 = vsel %vm191, %v314, %v310
  %v340 = vsel %vm193, %v318, %v339
  %v341 = vsel %vm195, %v322, %v340
  %v342 = vsel %vm197, %v326, %v341
  %v343 = vsel %vm199, %v330, %v342
  %v344 = vsel %vm201, %v334, %v343
  %v345 = vsel %vm203, %v338, %v344
  %v347 = vsel %vm206, %v345, 0.0
  %348 = vadd.xlane.f32.xlu0 %v347
  %v349 = vpop.xlane.xlu0 %348
  %v351 = vlaneseq
  %v352 = vshrl.u32 %v351, 7
  %v353 = vsub.s32 0, %v352
  %v354 = vrot.slane %v349, %v353
  %v355 = vlaneseq
  %v356 = vshrl.u32 %v355, 7
  %v357 = vsub.s32 1, %v356
  %v358 = vrot.slane %v349, %v357
  %v359 = vlaneseq
  %v360 = vshrl.u32 %v359, 7
  %v361 = vsub.s32 2, %v360
  %v362 = vrot.slane %v349, %v361
  %v363 = vlaneseq
  %v364 = vshrl.u32 %v363, 7
  %v365 = vsub.s32 3, %v364
  %v366 = vrot.slane %v349, %v365
  %v367 = vlaneseq
  %v368 = vshrl.u32 %v367, 7
  %v369 = vsub.s32 4, %v368
  %v370 = vrot.slane %v349, %v369
  %v371 = vlaneseq
  %v372 = vshrl.u32 %v371, 7
  %v373 = vsub.s32 5, %v372
  %v374 = vrot.slane %v349, %v373
  %v375 = vlaneseq
  %v376 = vshrl.u32 %v375, 7
  %v377 = vsub.s32 6, %v376
  %v378 = vrot.slane %v349, %v377
  %v379 = vlaneseq
  %v380 = vshrl.u32 %v379, 7
  %v381 = vsub.s32 7, %v380
  %v382 = vrot.slane %v349, %v381
  %v391 = vrcp.pop %v354
  %v392 = vmul.f32 %v260, %v391
  %v393 = vrcp.pop %v358
  %v394 = vmul.f32 %v262, %v393
  %v395 = vrcp.pop %v362
  %v396 = vmul.f32 %v264, %v395
  %v397 = vrcp.pop %v366
  %v398 = vmul.f32 %v266, %v397
  %v399 = vrcp.pop %v370
  %v400 = vmul.f32 %v268, %v399
  %v401 = vrcp.pop %v374
  %v402 = vmul.f32 %v270, %v401
  %v403 = vrcp.pop %v378
  %v404 = vmul.f32 %v272, %v403
  %v405 = vrcp.pop %v382
  %v406 = vmul.f32 %v274, %v405
  %v407 = vld [vmem:[%s2] sm:$0xff]
  %v408 = vld [vmem:[%s2 + $0x8] sm:$0xff]
  %v409 = vld [vmem:[%s2 + $0x10] sm:$0xff]
  %v410 = vld [vmem:[%s2 + $0x18] sm:$0xff]
  %v411 = vld [vmem:[%s2 + $0x20] sm:$0xff]
  %v412 = vld [vmem:[%s2 + $0x28] sm:$0xff]
  %v413 = vld [vmem:[%s2 + $0x30] sm:$0xff]
  %v414 = vld [vmem:[%s2 + $0x38] sm:$0xff]
  %416 = vset.pattern.permute.xlu0 0
  %417 = vperm.xlu0 %416, %v392
  %v418 = vpop.permute.xlu0 %417
  %421 = vset.pattern.permute.xlu0 0
  %422 = vperm.xlu0 %421, %v394
  %v423 = vpop.permute.xlu0 %422
  %426 = vset.pattern.permute.xlu0 0
  %427 = vperm.xlu0 %426, %v396
  %v428 = vpop.permute.xlu0 %427
  %431 = vset.pattern.permute.xlu0 0
  %432 = vperm.xlu0 %431, %v398
  %v433 = vpop.permute.xlu0 %432
  %436 = vset.pattern.permute.xlu0 0
  %437 = vperm.xlu0 %436, %v400
  %v438 = vpop.permute.xlu0 %437
  %441 = vset.pattern.permute.xlu0 0
  %442 = vperm.xlu0 %441, %v402
  %v443 = vpop.permute.xlu0 %442
  %446 = vset.pattern.permute.xlu0 0
  %447 = vperm.xlu0 %446, %v404
  %v448 = vpop.permute.xlu0 %447
  %451 = vset.pattern.permute.xlu0 0
  %452 = vperm.xlu0 %451, %v406
  %v453 = vpop.permute.xlu0 %452
  %v455 = vmul.f32 %v418, %v407
  %v456 = vmul.f32 %v423, %v408
  %v457 = vmul.f32 %v428, %v409
  %v458 = vmul.f32 %v433, %v410
  %v459 = vmul.f32 %v438, %v411
  %v460 = vmul.f32 %v443, %v412
  %v461 = vmul.f32 %v448, %v413
  %v462 = vmul.f32 %v453, %v414
  %v463 = vsel %vm124, %v455, 0.0
  %v464 = vrot.slane %v463, 4
  %v465 = vadd.f32 %v463, %v464
  %v466 = vrot.slane %v465, 2
  %v467 = vadd.f32 %v465, %v466
  %v468 = vrot.slane %v467, 1
  %v469 = vadd.f32 %v467, %v468
  %v470 = vsel %vm124, %v456, 0.0
  %v471 = vrot.slane %v470, 4
  %v472 = vadd.f32 %v470, %v471
  %v473 = vrot.slane %v472, 2
  %v474 = vadd.f32 %v472, %v473
  %v475 = vrot.slane %v474, 1
  %v476 = vadd.f32 %v474, %v475
  %v477 = vsel %vm124, %v457, 0.0
  %v478 = vrot.slane %v477, 4
  %v479 = vadd.f32 %v477, %v478
  %v480 = vrot.slane %v479, 2
  %v481 = vadd.f32 %v479, %v480
  %v482 = vrot.slane %v481, 1
  %v483 = vadd.f32 %v481, %v482
  %v484 = vsel %vm124, %v458, 0.0
  %v485 = vrot.slane %v484, 4
  %v486 = vadd.f32 %v484, %v485
  %v487 = vrot.slane %v486, 2
  %v488 = vadd.f32 %v486, %v487
  %v489 = vrot.slane %v488, 1
  %v490 = vadd.f32 %v488, %v489
  %v491 = vsel %vm124, %v459, 0.0
  %v492 = vrot.slane %v491, 4
  %v493 = vadd.f32 %v491, %v492
  %v494 = vrot.slane %v493, 2
  %v495 = vadd.f32 %v493, %v494
  %v496 = vrot.slane %v495, 1
  %v497 = vadd.f32 %v495, %v496
  %v498 = vsel %vm124, %v460, 0.0
  %v499 = vrot.slane %v498, 4
  %v500 = vadd.f32 %v498, %v499
  %v501 = vrot.slane %v500, 2
  %v502 = vadd.f32 %v500, %v501
  %v503 = vrot.slane %v502, 1
  %v504 = vadd.f32 %v502, %v503
  %v505 = vsel %vm124, %v461, 0.0
  %v506 = vrot.slane %v505, 4
  %v507 = vadd.f32 %v505, %v506
  %v508 = vrot.slane %v507, 2
  %v509 = vadd.f32 %v507, %v508
  %v510 = vrot.slane %v509, 1
  %v511 = vadd.f32 %v509, %v510
  %v512 = vsel %vm124, %v462, 0.0
  %v513 = vrot.slane %v512, 4
  %v514 = vadd.f32 %v512, %v513
  %v515 = vrot.slane %v514, 2
  %v516 = vadd.f32 %v514, %v515
  %v517 = vrot.slane %v516, 1
  %v518 = vadd.f32 %v516, %v517
  %v519 = vadd.f32 %v469, 0.0
  %v520 = vadd.f32 %v476, 0.0
  %v521 = vadd.f32 %v483, 0.0
  %v522 = vadd.f32 %v490, 0.0
  %v523 = vadd.f32 %v497, 0.0
  %v524 = vadd.f32 %v504, 0.0
  %v525 = vadd.f32 %v511, 0.0
  %v526 = vadd.f32 %v518, 0.0
  %v535 = vsel %vm191, %v520, %v519
  %v536 = vsel %vm193, %v521, %v535
  %v537 = vsel %vm195, %v522, %v536
  %v538 = vsel %vm197, %v523, %v537
  %v539 = vsel %vm199, %v524, %v538
  %v540 = vsel %vm201, %v525, %v539
  %v541 = vsel %vm203, %v526, %v540
  %543 = vst.msk [vmem:[%s3] sm:$0xff] %vm124, %v541
  %v544 = vlaneseq
  %v545 = vshrl.u32 %v544, 7
  %v546 = vsub.s32 %v158, %v545
  %v547 = vrot.slane %v418, %v546
  %v548 = vlaneseq
  %v549 = vshrl.u32 %v548, 7
  %v550 = vsub.s32 %v158, %v549
  %v551 = vrot.slane %v423, %v550
  %v552 = vlaneseq
  %v553 = vshrl.u32 %v552, 7
  %v554 = vsub.s32 %v158, %v553
  %v555 = vrot.slane %v428, %v554
  %v556 = vlaneseq
  %v557 = vshrl.u32 %v556, 7
  %v558 = vsub.s32 %v158, %v557
  %v559 = vrot.slane %v433, %v558
  %v560 = vlaneseq
  %v561 = vshrl.u32 %v560, 7
  %v562 = vsub.s32 %v158, %v561
  %v563 = vrot.slane %v438, %v562
  %v564 = vlaneseq
  %v565 = vshrl.u32 %v564, 7
  %v566 = vsub.s32 %v158, %v565
  %v567 = vrot.slane %v443, %v566
  %v568 = vlaneseq
  %v569 = vshrl.u32 %v568, 7
  %v570 = vsub.s32 %v158, %v569
  %v571 = vrot.slane %v448, %v570
  %v572 = vlaneseq
  %v573 = vshrl.u32 %v572, 7
  %v574 = vsub.s32 %v158, %v573
  %v575 = vrot.slane %v453, %v574
  %v576 = vsel %vm191, %v551, %v547
  %v577 = vsel %vm193, %v555, %v576
  %v578 = vsel %vm195, %v559, %v577
  %v579 = vsel %vm197, %v563, %v578
  %v580 = vsel %vm199, %v567, %v579
  %v581 = vsel %vm201, %v571, %v580
  %v582 = vsel %vm203, %v575, %v581
  %584 = vst.msk [vmem:[%s4] sm:$0xff] %vm206, %v582
  // Predicated region
  $region14: #{attention.1} parent=0 // pred_check
    _
  $region15: #{attention.1} parent=0 // pred_check_branch
    %586 = sbr.rel (0) target = $region17
  $region16: #{attention.1} parent=0 // pred_region
    _
  $region17: #{attention.1} parent=0 // pred_fallthru
    _
  // Predicated region
  $region18: #{attention.1} parent=0 // pred_check
    _
  $region19: #{attention.1} parent=0 // pred_check_branch
    %588 = sbr.rel (0) target = $region21
  $region20: #{attention.1} parent=0 // pred_region
    _
  $region21: #{attention.1} parent=0 // pred_fallthru
    _
  // Predicated region
  $region22: #{attention.1} parent=0 // pred_check
    _
  $region23: #{attention.1} parent=0 // pred_check_branch
    %590 = sbr.rel (0) target = $region25
  $region24: #{attention.1} parent=0 // pred_region
    _
  $region25: #{attention.1} parent=0 // pred_fallthru
    _
  // Predicated region
  $region26: #{attention.1} parent=0 // pred_check
    _
  $region27: #{attention.1} parent=0 // pred_check_branch
    %592 = sbr.rel (0) target = $region29
  $region28: #{attention.1} parent=0 // pred_region
    _
  $region29: #{attention.1} parent=0 // pred_fallthru
    _

</llo_original>
